<compile_context>
chip_gen: v7x
topology: tpu7x:2x2x1
jax: 0.10.0
libtpu: 0.0.40
codegen_flags: <defaults>
</compile_context>

<pallas_src>
import jax
import jax.numpy as jnp
from jax.experimental import pallas as pl
from jax.experimental.pallas import tpu as pltpu

_SELU_ALPHA = 1.6732632423543772
_SELU_SCALE = 1.0507009873554805

_LANE = 128          # lane width / MXU alignment target
_SUBLANE = 8         # sublane granularity for f32/bf16 blocks


def _round_up(x, m):
    return ((x + m - 1) // m) * m


def _selu_f32(x):
    # torch.nn.SELU: scale * (max(0,x) + min(0, alpha*(exp(x)-1)))
    # Clamp exp input so the discarded branch never overflows to +inf.
    return _SELU_SCALE * jnp.where(
        x > 0.0, x, _SELU_ALPHA * (jnp.exp(jnp.minimum(x, 0.0)) - 1.0)
    )


def _make_fused_kernel(num_layers):
    """Kernel: x_ref, (w1, b1, w2, b2, ..., wn, bn), o_ref."""

    def kernel(x_ref, *refs):
        o_ref = refs[-1]
        h = x_ref[...]  # bf16 (TM, K0_pad)
        for l in range(num_layers):
            w_ref = refs[2 * l]       # bf16 (K_pad, N_pad), VMEM-resident
            b_ref = refs[2 * l + 1]   # f32  (1, N_pad)
            acc = jnp.dot(h, w_ref[...], preferred_element_type=jnp.float32)
            acc = _selu_f32(acc + b_ref[...])
            if l < num_layers - 1:
                h = acc.astype(jnp.bfloat16)   # next MXU operand
            else:
                o_ref[...] = acc.astype(o_ref.dtype)

    return kernel


def prepare_ffnn_params(params):
    """Zero-pad every (w, b) to 128-aligned shapes; cast w to bf16, b to (1, N_pad) f32."""
    prepped = []
    for w, b in params:
        K, N = w.shape
        Kp, Np = _round_up(K, _LANE), _round_up(N, _LANE)
        wp = jnp.zeros((Kp, Np), jnp.bfloat16).at[:K, :N].set(w.astype(jnp.bfloat16))
        bp = jnp.zeros((1, Np), jnp.float32).at[:, :N].set(b.astype(jnp.float32))
        prepped.append((wp, bp))
    return prepped


def ffnn_forward(x, params, *, tm=256):
    """Fused FFNN forward. x: (M, K0) f32. params: list of (w (in,out), b (out,))."""
    M, K0 = x.shape
    prepped = prepare_ffnn_params(params)
    num_layers = len(prepped)

    K0p = prepped[0][0].shape[0]
    N_last = params[-1][0].shape[1]
    N_last_p = prepped[-1][0].shape[1]

    # Batch tile: big enough to pipeline for large M, small for tiny M.
    TM = min(tm, _round_up(M, _SUBLANE))
    Mp = _round_up(M, TM)

    # Pad input: batch to TM multiple, features to 128; cast to bf16 for the MXU.
    xp = jnp.zeros((Mp, K0p), jnp.bfloat16).at[:M, :K0].set(x.astype(jnp.bfloat16))

    in_specs = [pl.BlockSpec((TM, K0p), lambda i: (i, 0))]
    flat_wb = []
    for wp, bp in prepped:
        Kp, Np = wp.shape
        in_specs.append(pl.BlockSpec((Kp, Np), lambda i: (0, 0)))  # resident weight
        in_specs.append(pl.BlockSpec((1, Np), lambda i: (0, 0)))   # resident bias
        flat_wb.extend((wp, bp))

    out = pl.pallas_call(
        _make_fused_kernel(num_layers),
        out_shape=jax.ShapeDtypeStruct((Mp, N_last_p), jnp.float32),
        grid=(pl.cdiv(Mp, TM),),
        in_specs=in_specs,
        out_specs=pl.BlockSpec((TM, N_last_p), lambda i: (i, 0)),
        compiler_params=pltpu.CompilerParams(
            dimension_semantics=("parallel",),  # independent batch tiles (2 TCs on v7x)
        ),
    )(xp, *flat_wb)

    return out[:M, :N_last]


def init_ffnn_params(key, layers):
    """Deterministic params matching torch.nn.Linear(layers[i-1], layers[i]) shapes.

    Returns list of (w, b) with w already transposed to (in, out), f32.
    """
    params = []
    for i in range(1, len(layers)):
        fan_in, fan_out = layers[i - 1], layers[i]
        key, kw, kb = jax.random.split(key, 3)
        bound = 1.0 / (fan_in ** 0.5)  # torch Linear default uniform bound
        w_t = jax.random.uniform(
            kw, (fan_in, fan_out), jnp.float32, minval=-bound, maxval=bound
        )
        b = jax.random.uniform(
            kb, (fan_out,), jnp.float32, minval=-bound, maxval=bound
        )
        params.append((w_t, b))
    return params


def ffnn_reference_bf16(x, params):
    """Pure-JAX reference with the same bf16-matmul / f32-accumulate numerics."""
    h = x
    for w, b in params:
        acc = jnp.dot(
            h.astype(jnp.bfloat16),
            w.astype(jnp.bfloat16),
            preferred_element_type=jnp.float32,
        ) + b
        h = _selu_f32(acc)
    return h


def ffnn_reference_f32(x, params):
    """Pure-f32 reference (matches the PyTorch module's math)."""
    h = x
    for w, b in params:
        h = _selu_f32(h @ w + b)
    return h


if __name__ == "__main__":
    layers = [16, 32, 32, 8]   # FFNN(layers=[16, 32, 32, 8]) with default activations
    batch = 8

    key = jax.random.PRNGKey(0)
    key, kx = jax.random.split(key)
    x = jax.random.normal(kx, (batch, layers[0]), jnp.float32)
    params = init_ffnn_params(key, layers)

    out = ffnn_forward(x, params)
    out = jax.block_until_ready(out)
    assert out.shape == (batch, layers[-1])

    # Tight check vs a reference using the same bf16-MXU / f32-accumulate numerics.
    ref_bf16 = ffnn_reference_bf16(x, params)
    assert jnp.allclose(out, ref_bf16, atol=1e-4, rtol=1e-4), "mismatch vs bf16 reference"

    # Loose sanity check vs the full-f32 PyTorch-equivalent math.
    ref_f32 = ffnn_reference_f32(x, params)
    assert jnp.allclose(out, ref_f32, atol=5e-2, rtol=5e-2), "mismatch vs f32 reference"

    print("KERNEL_OK")
</pallas_src>

<mosaic_0001>
module attributes {stable_mosaic.version = 11 : i64} {
  func.func @kernel(%arg0: i32, %arg1: memref<8x128xbf16, #tpu.memory_space<vmem>>, %arg2: memref<128x128xbf16, #tpu.memory_space<vmem>>, %arg3: memref<1x128xf32, #tpu.memory_space<vmem>>, %arg4: memref<128x128xbf16, #tpu.memory_space<vmem>>, %arg5: memref<1x128xf32, #tpu.memory_space<vmem>>, %arg6: memref<128x128xbf16, #tpu.memory_space<vmem>>, %arg7: memref<1x128xf32, #tpu.memory_space<vmem>>, %arg8: memref<8x128xf32, #tpu.memory_space<vmem>>) attributes {dimension_semantics = [#tpu.dimension_semantics<parallel>], iteration_bounds = array<i64: 1>, scalar_prefetch = 0 : i64, scratch_operands = 0 : i64, tpu.core_type = #tpu.core_type<tc>, window_params = [{transform_indices = @transform_0, window_bounds = array<i64: 8, 128>}, {pipeline_mode = #tpu.pipeline_mode<synchronous>, transform_indices = @transform_1, window_bounds = array<i64: 128, 128>}, {pipeline_mode = #tpu.pipeline_mode<synchronous>, transform_indices = @transform_2, window_bounds = array<i64: 1, 128>}, {pipeline_mode = #tpu.pipeline_mode<synchronous>, transform_indices = @transform_3, window_bounds = array<i64: 128, 128>}, {pipeline_mode = #tpu.pipeline_mode<synchronous>, transform_indices = @transform_4, window_bounds = array<i64: 1, 128>}, {pipeline_mode = #tpu.pipeline_mode<synchronous>, transform_indices = @transform_5, window_bounds = array<i64: 128, 128>}, {pipeline_mode = #tpu.pipeline_mode<synchronous>, transform_indices = @transform_6, window_bounds = array<i64: 1, 128>}, {transform_indices = @transform_7, window_bounds = array<i64: 8, 128>}]} {
    %c0 = arith.constant 0 : index
    %c0_0 = arith.constant 0 : index
    %0 = vector.load %arg1[%c0, %c0_0] : memref<8x128xbf16, #tpu.memory_space<vmem>>, vector<8x128xbf16>
    %c0_1 = arith.constant 0 : index
    %c0_2 = arith.constant 0 : index
    %1 = vector.load %arg2[%c0_1, %c0_2] : memref<128x128xbf16, #tpu.memory_space<vmem>>, vector<128x128xbf16>
    %cst = arith.constant dense<0.000000e+00> : vector<8x128xf32>
    %2 = tpu.matmul %0, %1, %cst {dimension_numbers = #tpu.dot_dimension_numbers<[1], [0], [0], [1], [0, 0, 1, 1], [], []>} : vector<8x128xbf16>, vector<128x128xbf16>, vector<8x128xf32> -> vector<8x128xf32>
    %c0_3 = arith.constant 0 : index
    %c0_4 = arith.constant 0 : index
    %3 = vector.load %arg3[%c0_3, %c0_4] : memref<1x128xf32, #tpu.memory_space<vmem>>, vector<1x128xf32>
    %4 = vector.broadcast %3 : vector<1x128xf32> to vector<8x128xf32>
    %5 = arith.addf %2, %4 : vector<8x128xf32>
    %cst_5 = arith.constant 0.000000e+00 : f32
    %6 = vector.broadcast %cst_5 : f32 to vector<8x128xf32>
    %7 = arith.cmpf ogt, %5, %6 : vector<8x128xf32>
    %cst_6 = arith.constant 0.000000e+00 : f32
    %8 = vector.broadcast %cst_6 : f32 to vector<8x128xf32>
    %9 = arith.minimumf %5, %8 : vector<8x128xf32>
    %10 = math.exp %9 : vector<8x128xf32>
    %cst_7 = arith.constant 1.000000e+00 : f32
    %11 = vector.broadcast %cst_7 : f32 to vector<8x128xf32>
    %12 = arith.subf %10, %11 : vector<8x128xf32>
    %cst_8 = arith.constant 1.67326319 : f32
    %13 = vector.broadcast %cst_8 : f32 to vector<8x128xf32>
    %14 = arith.mulf %13, %12 : vector<8x128xf32>
    %15 = arith.select %7, %5, %14 : vector<8x128xi1>, vector<8x128xf32>
    %cst_9 = arith.constant 1.05070102 : f32
    %16 = vector.broadcast %cst_9 : f32 to vector<8x128xf32>
    %17 = arith.mulf %16, %15 : vector<8x128xf32>
    %18 = arith.truncf %17 : vector<8x128xf32> to vector<8x128xbf16>
    %c0_10 = arith.constant 0 : index
    %c0_11 = arith.constant 0 : index
    %19 = vector.load %arg4[%c0_10, %c0_11] : memref<128x128xbf16, #tpu.memory_space<vmem>>, vector<128x128xbf16>
    %cst_12 = arith.constant dense<0.000000e+00> : vector<8x128xf32>
    %20 = tpu.matmul %18, %19, %cst_12 {dimension_numbers = #tpu.dot_dimension_numbers<[1], [0], [0], [1], [0, 0, 1, 1], [], []>} : vector<8x128xbf16>, vector<128x128xbf16>, vector<8x128xf32> -> vector<8x128xf32>
    %c0_13 = arith.constant 0 : index
    %c0_14 = arith.constant 0 : index
    %21 = vector.load %arg5[%c0_13, %c0_14] : memref<1x128xf32, #tpu.memory_space<vmem>>, vector<1x128xf32>
    %22 = vector.broadcast %21 : vector<1x128xf32> to vector<8x128xf32>
    %23 = arith.addf %20, %22 : vector<8x128xf32>
    %cst_15 = arith.constant 0.000000e+00 : f32
    %24 = vector.broadcast %cst_15 : f32 to vector<8x128xf32>
    %25 = arith.cmpf ogt, %23, %24 : vector<8x128xf32>
    %cst_16 = arith.constant 0.000000e+00 : f32
    %26 = vector.broadcast %cst_16 : f32 to vector<8x128xf32>
    %27 = arith.minimumf %23, %26 : vector<8x128xf32>
    %28 = math.exp %27 : vector<8x128xf32>
    %cst_17 = arith.constant 1.000000e+00 : f32
    %29 = vector.broadcast %cst_17 : f32 to vector<8x128xf32>
    %30 = arith.subf %28, %29 : vector<8x128xf32>
    %cst_18 = arith.constant 1.67326319 : f32
    %31 = vector.broadcast %cst_18 : f32 to vector<8x128xf32>
    %32 = arith.mulf %31, %30 : vector<8x128xf32>
    %33 = arith.select %25, %23, %32 : vector<8x128xi1>, vector<8x128xf32>
    %cst_19 = arith.constant 1.05070102 : f32
    %34 = vector.broadcast %cst_19 : f32 to vector<8x128xf32>
    %35 = arith.mulf %34, %33 : vector<8x128xf32>
    %36 = arith.truncf %35 : vector<8x128xf32> to vector<8x128xbf16>
    %c0_20 = arith.constant 0 : index
    %c0_21 = arith.constant 0 : index
    %37 = vector.load %arg6[%c0_20, %c0_21] : memref<128x128xbf16, #tpu.memory_space<vmem>>, vector<128x128xbf16>
    %cst_22 = arith.constant dense<0.000000e+00> : vector<8x128xf32>
    %38 = tpu.matmul %36, %37, %cst_22 {dimension_numbers = #tpu.dot_dimension_numbers<[1], [0], [0], [1], [0, 0, 1, 1], [], []>} : vector<8x128xbf16>, vector<128x128xbf16>, vector<8x128xf32> -> vector<8x128xf32>
    %c0_23 = arith.constant 0 : index
    %c0_24 = arith.constant 0 : index
    %39 = vector.load %arg7[%c0_23, %c0_24] : memref<1x128xf32, #tpu.memory_space<vmem>>, vector<1x128xf32>
    %40 = vector.broadcast %39 : vector<1x128xf32> to vector<8x128xf32>
    %41 = arith.addf %38, %40 : vector<8x128xf32>
    %cst_25 = arith.constant 0.000000e+00 : f32
    %42 = vector.broadcast %cst_25 : f32 to vector<8x128xf32>
    %43 = arith.cmpf ogt, %41, %42 : vector<8x128xf32>
    %cst_26 = arith.constant 0.000000e+00 : f32
    %44 = vector.broadcast %cst_26 : f32 to vector<8x128xf32>
    %45 = arith.minimumf %41, %44 : vector<8x128xf32>
    %46 = math.exp %45 : vector<8x128xf32>
    %cst_27 = arith.constant 1.000000e+00 : f32
    %47 = vector.broadcast %cst_27 : f32 to vector<8x128xf32>
    %48 = arith.subf %46, %47 : vector<8x128xf32>
    %cst_28 = arith.constant 1.67326319 : f32
    %49 = vector.broadcast %cst_28 : f32 to vector<8x128xf32>
    %50 = arith.mulf %49, %48 : vector<8x128xf32>
    %51 = arith.select %43, %41, %50 : vector<8x128xi1>, vector<8x128xf32>
    %cst_29 = arith.constant 1.05070102 : f32
    %52 = vector.broadcast %cst_29 : f32 to vector<8x128xf32>
    %53 = arith.mulf %52, %51 : vector<8x128xf32>
    %c0_30 = arith.constant 0 : index
    %c0_31 = arith.constant 0 : index
    %54 = vector.load %arg8[%c0_30, %c0_31] : memref<8x128xf32, #tpu.memory_space<vmem>>, vector<8x128xf32>
    tpu.vector_store %arg8[%c0_30, %c0_31], %53 {strides = array<i32>} : memref<8x128xf32, #tpu.memory_space<vmem>>, vector<8x128xf32>,
    return
  }
  func.func @transform_0(%arg0: i32) -> (i32, i32) {
    %c0_i32 = arith.constant 0 : i32
    %c0_i32_0 = arith.constant 0 : i32
    return %arg0, %c0_i32 : i32, i32
  }
  func.func @transform_1(%arg0: i32) -> (i32, i32) {
    %c0_i32 = arith.constant 0 : i32
    %c0_i32_0 = arith.constant 0 : i32
    %c0_i32_1 = arith.constant 0 : i32
    return %c0_i32, %c0_i32_0 : i32, i32
  }
  func.func @transform_2(%arg0: i32) -> (i32, i32) {
    %c0_i32 = arith.constant 0 : i32
    %c0_i32_0 = arith.constant 0 : i32
    %c0_i32_1 = arith.constant 0 : i32
    return %c0_i32, %c0_i32_0 : i32, i32
  }
  func.func @transform_3(%arg0: i32) -> (i32, i32) {
    %c0_i32 = arith.constant 0 : i32
    %c0_i32_0 = arith.constant 0 : i32
    %c0_i32_1 = arith.constant 0 : i32
    return %c0_i32, %c0_i32_0 : i32, i32
  }
  func.func @transform_4(%arg0: i32) -> (i32, i32) {
    %c0_i32 = arith.constant 0 : i32
    %c0_i32_0 = arith.constant 0 : i32
    %c0_i32_1 = arith.constant 0 : i32
    return %c0_i32, %c0_i32_0 : i32, i32
  }
  func.func @transform_5(%arg0: i32) -> (i32, i32) {
    %c0_i32 = arith.constant 0 : i32
    %c0_i32_0 = arith.constant 0 : i32
    %c0_i32_1 = arith.constant 0 : i32
    return %c0_i32, %c0_i32_0 : i32, i32
  }
  func.func @transform_6(%arg0: i32) -> (i32, i32) {
    %c0_i32 = arith.constant 0 : i32
    %c0_i32_0 = arith.constant 0 : i32
    %c0_i32_1 = arith.constant 0 : i32
    return %c0_i32, %c0_i32_0 : i32, i32
  }
  func.func @transform_7(%arg0: i32) -> (i32, i32) {
    %c0_i32 = arith.constant 0 : i32
    %c0_i32_0 = arith.constant 0 : i32
    return %arg0, %c0_i32 : i32, i32
  }
}

</mosaic_0001>

<llo_original>
// kernel: tpu_custom_call.1
$region0: #{tpu_custom_call.1}
  #allocation0 [shape = 'u32[]', space=smem, size = 0x4, offset = 0x4, fixed_abs, tag = 'smem constant byte address 0x4 - core index']
  #allocation1 [shape = 'u32[144,128]{1,0:T(1,128)}', space=vmem, size = 0x12000, scoped, tag = 'internal scratch']
  %s0 = inlined_call_operand.hbm [shape: bf16[8,128], index: 0, kind: input, shape index: {}]
  %s1 = inlined_call_operand.hbm [shape: bf16[128,128], index: 1, kind: input, shape index: {}]
  %s2 = inlined_call_operand.vmem [shape: f32[1,128], index: 2, kind: input, shape index: {}]
  %s3 = inlined_call_operand.hbm [shape: bf16[128,128], index: 3, kind: input, shape index: {}]
  %s4 = inlined_call_operand.vmem [shape: f32[1,128], index: 4, kind: input, shape index: {}]
  %s5 = inlined_call_operand.hbm [shape: bf16[128,128], index: 5, kind: input, shape index: {}]
  %s6 = inlined_call_operand.vmem [shape: f32[1,128], index: 6, kind: input, shape index: {}]
  %s7 = inlined_call_operand.hbm [shape: f32[8,128], index: 7, kind: output, shape index: {}]
  %s8 = sld [smem:[#allocation0]]
  $region54: #{tpu_custom_call.1} parent=0
    _
  %s10 = ssub.s32 1, %s8
  %s11 = scalar_select 0, %s10, %s8
  $region1: #{tpu_custom_call.1} parent=0
    #allocation2 [shape = 'u8[2048]{0}', space=vmem, size = 0x800, scoped, tag = 'input window, operand 0, single buffered']
    #allocation3 [shape = 's32[1]{0}', space=sflag, size = 0x4, scoped, tag = 'scoped memory for tpu_custom_call.1']
    #allocation4 [shape = 's32[1]{0}', space=sflag, size = 0x4, scoped, tag = 'scoped memory for tpu_custom_call.1']
    #allocation5 [shape = 'u8[32768]{0}', space=vmem, size = 0x8000, scoped, tag = 'input window, operand 1, single buffered']
    #allocation6 [shape = 's32[1]{0}', space=sflag, size = 0x4, scoped, tag = 'scoped memory for tpu_custom_call.1']
    #allocation7 [shape = 'u8[32768]{0}', space=vmem, size = 0x8000, scoped, tag = 'input window, operand 3, single buffered']
    #allocation8 [shape = 'u8[32768]{0}', space=vmem, size = 0x8000, scoped, tag = 'input window, operand 5, single buffered']
    #allocation9 [shape = 's32[1]{0}', space=sflag, size = 0x4, scoped, tag = 'scoped memory for tpu_custom_call.1']
    #allocation10 [shape = 'u8[4096]{0}', space=vmem, size = 0x1000, scoped, tag = 'output window, operand 0, single buffered']
    %12 = vsyncpa [#allocation3], 0
    %13 = vsyncpa [#allocation6], 0
    %14 = vsyncpa [#allocation9], 0
    %15 = vsyncpa [#allocation4], 0
    // Predicated region
    $region2: #{tpu_custom_call.1} parent=1 // pred_check
      _
    $region3: #{tpu_custom_call.1} parent=1 // pred_check_branch
      %17 = sbr.rel (0) target = $region5
    $region4: #{tpu_custom_call.1} parent=1 // pred_region
      %s19 = ssub.s32 64, 64
      %20 = vsyncadd [#allocation3], %s19
      %s22 = sshll.u32 [#allocation2], 4
      %s23 = int_to_ptr.vmem [resolvable:$true] %s22
      %25 = dma.hbm_to_vmem [thread:$0]  %s0, 64, %s23, [#allocation3]
    $region5: #{tpu_custom_call.1} parent=1 // pred_fallthru
      _
    // Predicated region
    $region6: #{tpu_custom_call.1} parent=1 // pred_check
      _
    $region7: #{tpu_custom_call.1} parent=1 // pred_check_branch
      %27 = sbr.rel (0) target = $region9
    $region8: #{tpu_custom_call.1} parent=1 // pred_region
      %s29 = ssub.s32 1024, 1024
      %30 = vsyncadd [#allocation6], %s29
      %s31 = sshll.u32 [#allocation5], 4
      %s32 = int_to_ptr.vmem [resolvable:$true] %s31
      %37 = dma.hbm_to_vmem [thread:$0]  %s1, 1024, %s32, [#allocation6], 64, 64, 4
    $region9: #{tpu_custom_call.1} parent=1 // pred_fallthru
      _
    // Predicated region
    $region10: #{tpu_custom_call.1} parent=1 // pred_check
      _
    $region11: #{tpu_custom_call.1} parent=1 // pred_check_branch
      %39 = sbr.rel (0) target = $region13
    $region12: #{tpu_custom_call.1} parent=1 // pred_region
      _
    $region13: #{tpu_custom_call.1} parent=1 // pred_fallthru
      _
    // Predicated region
    $region14: #{tpu_custom_call.1} parent=1 // pred_check
      _
    $region15: #{tpu_custom_call.1} parent=1 // pred_check_branch
      %41 = sbr.rel (0) target = $region17
    $region16: #{tpu_custom_call.1} parent=1 // pred_region
      %s43 = ssub.s32 1024, 1024
      %44 = vsyncadd [#allocation6], %s43
      %s45 = sshll.u32 [#allocation7], 4
      %s46 = int_to_ptr.vmem [resolvable:$true] %s45
      %51 = dma.hbm_to_vmem [thread:$0]  %s3, 1024, %s46, [#allocation6], 64, 64, 4
    $region17: #{tpu_custom_call.1} parent=1 // pred_fallthru
      _
    // Predicated region
    $region18: #{tpu_custom_call.1} parent=1 // pred_check
      _
    $region19: #{tpu_custom_call.1} parent=1 // pred_check_branch
      %53 = sbr.rel (0) target = $region21
    $region20: #{tpu_custom_call.1} parent=1 // pred_region
      _
    $region21: #{tpu_custom_call.1} parent=1 // pred_fallthru
      _
    // Predicated region
    $region22: #{tpu_custom_call.1} parent=1 // pred_check
      _
    $region23: #{tpu_custom_call.1} parent=1 // pred_check_branch
      %55 = sbr.rel (0) target = $region25
    $region24: #{tpu_custom_call.1} parent=1 // pred_region
      %s57 = ssub.s32 1024, 1024
      %58 = vsyncadd [#allocation9], %s57
      %s59 = sshll.u32 [#allocation8], 4
      %s60 = int_to_ptr.vmem [resolvable:$true] %s59
      %65 = dma.hbm_to_vmem [thread:$0]  %s5, 1024, %s60, [#allocation9], 64, 64, 4
    $region25: #{tpu_custom_call.1} parent=1 // pred_fallthru
      _
    // Predicated region
    $region26: #{tpu_custom_call.1} parent=1 // pred_check
      _
    $region27: #{tpu_custom_call.1} parent=1 // pred_check_branch
      %67 = sbr.rel (0) target = $region29
    $region28: #{tpu_custom_call.1} parent=1 // pred_region
      _
    $region29: #{tpu_custom_call.1} parent=1 // pred_fallthru
      _
    // Predicated region
    $region30: #{tpu_custom_call.1} parent=1 // pred_check
      _
    $region31: #{tpu_custom_call.1} parent=1 // pred_check_branch
      %69 = sbr.rel (0) target = $region33
    $region32: #{tpu_custom_call.1} parent=1 // pred_region
      %70 = dma.done [#allocation3], 64
    $region33: #{tpu_custom_call.1} parent=1 // pred_fallthru
      _
    // Predicated region
    $region34: #{tpu_custom_call.1} parent=1 // pred_check
      _
    $region35: #{tpu_custom_call.1} parent=1 // pred_check_branch
      %72 = sbr.rel (0) target = $region37
    $region36: #{tpu_custom_call.1} parent=1 // pred_region
      %73 = dma.done [#allocation6], 1024
    $region37: #{tpu_custom_call.1} parent=1 // pred_fallthru
      _
    // Predicated region
    $region38: #{tpu_custom_call.1} parent=1 // pred_check
      _
    $region39: #{tpu_custom_call.1} parent=1 // pred_check_branch
      %75 = sbr.rel (0) target = $region41
    $region40: #{tpu_custom_call.1} parent=1 // pred_region
      %76 = dma.done [#allocation6], 1024
    $region41: #{tpu_custom_call.1} parent=1 // pred_fallthru
      _
    // Predicated region
    $region42: #{tpu_custom_call.1} parent=1 // pred_check
      _
    $region43: #{tpu_custom_call.1} parent=1 // pred_check_branch
      %78 = sbr.rel (0) target = $region45
    $region44: #{tpu_custom_call.1} parent=1 // pred_region
      %79 = dma.done [#allocation9], 1024
    $region45: #{tpu_custom_call.1} parent=1 // pred_fallthru
      _
    %v81 = vld [vmem:[#allocation2] sm:$0xf]
    %v82 = vld [vmem:[#allocation5] sm:$0xf]
    %v83 = vld [vmem:[#allocation5 + $0x4] sm:$0xf]
    %v84 = vld [vmem:[#allocation5 + $0x8] sm:$0xf]
    %v85 = vld [vmem:[#allocation5 + $0xc] sm:$0xf]
    %v86 = vld [vmem:[#allocation5 + $0x10] sm:$0xf]
    %v87 = vld [vmem:[#allocation5 + $0x14] sm:$0xf]
    %v88 = vld [vmem:[#allocation5 + $0x18] sm:$0xf]
    %v89 = vld [vmem:[#allocation5 + $0x1c] sm:$0xf]
    %v90 = vld [vmem:[#allocation5 + $0x20] sm:$0xf]
    %v91 = vld [vmem:[#allocation5 + $0x24] sm:$0xf]
    %v92 = vld [vmem:[#allocation5 + $0x28] sm:$0xf]
    %v93 = vld [vmem:[#allocation5 + $0x2c] sm:$0xf]
    %v94 = vld [vmem:[#allocation5 + $0x30] sm:$0xf]
    %v95 = vld [vmem:[#allocation5 + $0x34] sm:$0xf]
    %v96 = vld [vmem:[#allocation5 + $0x38] sm:$0xf]
    %v97 = vld [vmem:[#allocation5 + $0x3c] sm:$0xf]
    %v98 = vld [vmem:[%s2] sm:$0x1]
    %v100 = vlaneseq
    %v101 = vshrl.u32 %v100, 7
    %v102 = vsub.s32 0, %v101
    %v103 = vrot.slane %v98, %v102
    %v121 = vunpack.c.l.b16 %v82
    %v122 = vunpack.c.l.b16 %v83
    %v123 = vunpack.c.l.b16 %v84
    %v124 = vunpack.c.l.b16 %v85
    %v125 = vunpack.c.l.b16 %v86
    %v126 = vunpack.c.l.b16 %v87
    %v127 = vunpack.c.l.b16 %v88
    %v128 = vunpack.c.l.b16 %v89
    %v129 = vunpack.c.l.b16 %v90
    %v130 = vunpack.c.l.b16 %v91
    %v131 = vunpack.c.l.b16 %v92
    %v132 = vunpack.c.l.b16 %v93
    %v133 = vunpack.c.l.b16 %v94
    %v134 = vunpack.c.l.b16 %v95
    %v135 = vunpack.c.l.b16 %v96
    %v136 = vunpack.c.l.b16 %v97
    %v137 = vpack.c.b16 %v122, %v121
    %v138 = vpack.c.b16 %v124, %v123
    %v139 = vpack.c.b16 %v126, %v125
    %v140 = vpack.c.b16 %v128, %v127
    %v141 = vpack.c.b16 %v130, %v129
    %v142 = vpack.c.b16 %v132, %v131
    %v143 = vpack.c.b16 %v134, %v133
    %v144 = vpack.c.b16 %v136, %v135
    %153 = vmatprep.subr.bf16.mxu0 0
    %154 = vmatpush1.bf16.msra.mxu0 %v137
    %155 = vmatprep.subr.bf16.mxu0 0
    %156 = vmatpush1.bf16.msra.mxu0 %v138
    %157 = vmatprep.subr.bf16.mxu0 0
    %158 = vmatpush1.bf16.msra.mxu0 %v139
    %159 = vmatprep.subr.bf16.mxu0 0
    %160 = vmatpush1.bf16.msra.mxu0 %v140
    %161 = vmatprep.subr.bf16.mxu0 0
    %162 = vmatpush1.bf16.msra.mxu0 %v141
    %163 = vmatprep.subr.bf16.mxu0 0
    %164 = vmatpush1.bf16.msra.mxu0 %v142
    %165 = vmatprep.subr.bf16.mxu0 0
    %166 = vmatpush1.bf16.msra.mxu0 %v143
    %167 = vmatprep.subr.bf16.mxu0 0
    %168 = vmatpush1.bf16.msra.mxu0 %v144
    %169 = vmatprep.subr.bf16.mxu0 0
    %170 = vmatpush1.bf16.msra.mxu0 0
    %171 = vmatprep.subr.bf16.mxu0 0
    %172 = vmatpush1.bf16.msra.mxu0 0
    %173 = vmatprep.subr.bf16.mxu0 0
    %174 = vmatpush1.bf16.msra.mxu0 0
    %175 = vmatprep.subr.bf16.mxu0 0
    %176 = vmatpush1.bf16.msra.mxu0 0
    %177 = vmatprep.subr.bf16.mxu0 0
    %178 = vmatpush1.bf16.msra.mxu0 0
    %179 = vmatprep.subr.bf16.mxu0 0
    %180 = vmatpush1.bf16.msra.mxu0 0
    %181 = vmatprep.subr.bf16.mxu0 0
    %182 = vmatpush1.bf16.msra.mxu0 0
    %183 = vmatprep.subr.bf16.mxu0 0
    %184 = vmatpush1.bf16.msra.mxu0 0
    %185 = vmatprep.mubr.bf16.mxu0 0
    %186 = vmatmul.mubr.bf16.gmra.mrb[0].mxu0 %v81
    %v187 = vpop.f32.mrb[0].mxu0
    %v188 = vadd.f32 %v103, %v187
    %v189 = vpop.f32.mrb[0].mxu0
    %v190 = vpop.f32.mrb[0].mxu0
    %v191 = vpop.f32.mrb[0].mxu0
    %192 = vdwg.mxu0
    %vm193 = vcmp.gt.f32.partialorder %v188, 0.0
    %v194 = vmin.f32 %v188, 0.0
    %v195 = vmul.f32 %v194, 1.442695
    %v196 = vpow.pop %v195
    %v197 = vsub.f32 %v196, 1.0
    %v198 = vmul.f32 %v197, 1.6732632
    %v199 = vsel %vm193, %v188, %v198
    %v200 = vmul.f32 %v199, 1.050701
    %v201 = vpack.c.bf16 %v200, %v200
    %v202 = vld [vmem:[#allocation7] sm:$0xf]
    %v203 = vld [vmem:[#allocation7 + $0x4] sm:$0xf]
    %v204 = vld [vmem:[#allocation7 + $0x8] sm:$0xf]
    %v205 = vld [vmem:[#allocation7 + $0xc] sm:$0xf]
    %v206 = vld [vmem:[#allocation7 + $0x10] sm:$0xf]
    %v207 = vld [vmem:[#allocation7 + $0x14] sm:$0xf]
    %v208 = vld [vmem:[#allocation7 + $0x18] sm:$0xf]
    %v209 = vld [vmem:[#allocation7 + $0x1c] sm:$0xf]
    %v210 = vld [vmem:[#allocation7 + $0x20] sm:$0xf]
    %v211 = vld [vmem:[#allocation7 + $0x24] sm:$0xf]
    %v212 = vld [vmem:[#allocation7 + $0x28] sm:$0xf]
    %v213 = vld [vmem:[#allocation7 + $0x2c] sm:$0xf]
    %v214 = vld [vmem:[#allocation7 + $0x30] sm:$0xf]
    %v215 = vld [vmem:[#allocation7 + $0x34] sm:$0xf]
    %v216 = vld [vmem:[#allocation7 + $0x38] sm:$0xf]
    %v217 = vld [vmem:[#allocation7 + $0x3c] sm:$0xf]
    %v218 = vld [vmem:[%s4] sm:$0x1]
    %v220 = vlaneseq
    %v221 = vshrl.u32 %v220, 7
    %v222 = vsub.s32 0, %v221
    %v223 = vrot.slane %v218, %v222
    %v241 = vunpack.c.l.b16 %v202
    %v242 = vunpack.c.l.b16 %v203
    %v243 = vunpack.c.l.b16 %v204
    %v244 = vunpack.c.l.b16 %v205
    %v245 = vunpack.c.l.b16 %v206
    %v246 = vunpack.c.l.b16 %v207
    %v247 = vunpack.c.l.b16 %v208
    %v248 = vunpack.c.l.b16 %v209
    %v249 = vunpack.c.l.b16 %v210
    %v250 = vunpack.c.l.b16 %v211
    %v251 = vunpack.c.l.b16 %v212
    %v252 = vunpack.c.l.b16 %v213
    %v253 = vunpack.c.l.b16 %v214
    %v254 = vunpack.c.l.b16 %v215
    %v255 = vunpack.c.l.b16 %v216
    %v256 = vunpack.c.l.b16 %v217
    %v257 = vpack.c.b16 %v242, %v241
    %v258 = vpack.c.b16 %v244, %v243
    %v259 = vpack.c.b16 %v246, %v245
    %v260 = vpack.c.b16 %v248, %v247
    %v261 = vpack.c.b16 %v250, %v249
    %v262 = vpack.c.b16 %v252, %v251
    %v263 = vpack.c.b16 %v254, %v253
    %v264 = vpack.c.b16 %v256, %v255
    %273 = vmatprep.subr.bf16.mxu0 0
    %274 = vmatpush1.bf16.msra.mxu0 %v257
    %275 = vmatprep.subr.bf16.mxu0 0
    %276 = vmatpush1.bf16.msra.mxu0 %v258
    %277 = vmatprep.subr.bf16.mxu0 0
    %278 = vmatpush1.bf16.msra.mxu0 %v259
    %279 = vmatprep.subr.bf16.mxu0 0
    %280 = vmatpush1.bf16.msra.mxu0 %v260
    %281 = vmatprep.subr.bf16.mxu0 0
    %282 = vmatpush1.bf16.msra.mxu0 %v261
    %283 = vmatprep.subr.bf16.mxu0 0
    %284 = vmatpush1.bf16.msra.mxu0 %v262
    %285 = vmatprep.subr.bf16.mxu0 0
    %286 = vmatpush1.bf16.msra.mxu0 %v263
    %287 = vmatprep.subr.bf16.mxu0 0
    %288 = vmatpush1.bf16.msra.mxu0 %v264
    %289 = vmatprep.subr.bf16.mxu0 0
    %290 = vmatpush1.bf16.msra.mxu0 0
    %291 = vmatprep.subr.bf16.mxu0 0
    %292 = vmatpush1.bf16.msra.mxu0 0
    %293 = vmatprep.subr.bf16.mxu0 0
    %294 = vmatpush1.bf16.msra.mxu0 0
    %295 = vmatprep.subr.bf16.mxu0 0
    %296 = vmatpush1.bf16.msra.mxu0 0
    %297 = vmatprep.subr.bf16.mxu0 0
    %298 = vmatpush1.bf16.msra.mxu0 0
    %299 = vmatprep.subr.bf16.mxu0 0
    %300 = vmatpush1.bf16.msra.mxu0 0
    %301 = vmatprep.subr.bf16.mxu0 0
    %302 = vmatpush1.bf16.msra.mxu0 0
    %303 = vmatprep.subr.bf16.mxu0 0
    %304 = vmatpush1.bf16.msra.mxu0 0
    %305 = vmatprep.mubr.bf16.mxu0 0
    %306 = vmatmul.mubr.bf16.gmra.mrb[0].mxu0 %v201
    %v307 = vpop.f32.mrb[0].mxu0
    %v308 = vadd.f32 %v223, %v307
    %v309 = vpop.f32.mrb[0].mxu0
    %v310 = vpop.f32.mrb[0].mxu0
    %v311 = vpop.f32.mrb[0].mxu0
    %312 = vdwg.mxu0
    %vm313 = vcmp.gt.f32.partialorder %v308, 0.0
    %v314 = vmin.f32 %v308, 0.0
    %v315 = vmul.f32 %v314, 1.442695
    %v316 = vpow.pop %v315
    %v317 = vsub.f32 %v316, 1.0
    %v318 = vmul.f32 %v317, 1.6732632
    %v319 = vsel %vm313, %v308, %v318
    %v320 = vmul.f32 %v319, 1.050701
    %v321 = vpack.c.bf16 %v320, %v320
    %v322 = vld [vmem:[#allocation8] sm:$0xf]
    %v323 = vld [vmem:[#allocation8 + $0x4] sm:$0xf]
    %v324 = vld [vmem:[#allocation8 + $0x8] sm:$0xf]
    %v325 = vld [vmem:[#allocation8 + $0xc] sm:$0xf]
    %v326 = vld [vmem:[#allocation8 + $0x10] sm:$0xf]
    %v327 = vld [vmem:[#allocation8 + $0x14] sm:$0xf]
    %v328 = vld [vmem:[#allocation8 + $0x18] sm:$0xf]
    %v329 = vld [vmem:[#allocation8 + $0x1c] sm:$0xf]
    %v330 = vld [vmem:[#allocation8 + $0x20] sm:$0xf]
    %v331 = vld [vmem:[#allocation8 + $0x24] sm:$0xf]
    %v332 = vld [vmem:[#allocation8 + $0x28] sm:$0xf]
    %v333 = vld [vmem:[#allocation8 + $0x2c] sm:$0xf]
    %v334 = vld [vmem:[#allocation8 + $0x30] sm:$0xf]
    %v335 = vld [vmem:[#allocation8 + $0x34] sm:$0xf]
    %v336 = vld [vmem:[#allocation8 + $0x38] sm:$0xf]
    %v337 = vld [vmem:[#allocation8 + $0x3c] sm:$0xf]
    %v338 = vld [vmem:[%s6] sm:$0x1]
    %v340 = vlaneseq
    %v341 = vshrl.u32 %v340, 7
    %v342 = vsub.s32 0, %v341
    %v343 = vrot.slane %v338, %v342
    %v361 = vunpack.c.l.b16 %v322
    %v362 = vunpack.c.l.b16 %v323
    %v363 = vunpack.c.l.b16 %v324
    %v364 = vunpack.c.l.b16 %v325
    %v365 = vunpack.c.l.b16 %v326
    %v366 = vunpack.c.l.b16 %v327
    %v367 = vunpack.c.l.b16 %v328
    %v368 = vunpack.c.l.b16 %v329
    %v369 = vunpack.c.l.b16 %v330
    %v370 = vunpack.c.l.b16 %v331
    %v371 = vunpack.c.l.b16 %v332
    %v372 = vunpack.c.l.b16 %v333
    %v373 = vunpack.c.l.b16 %v334
    %v374 = vunpack.c.l.b16 %v335
    %v375 = vunpack.c.l.b16 %v336
    %v376 = vunpack.c.l.b16 %v337
    %v377 = vpack.c.b16 %v362, %v361
    %v378 = vpack.c.b16 %v364, %v363
    %v379 = vpack.c.b16 %v366, %v365
    %v380 = vpack.c.b16 %v368, %v367
    %v381 = vpack.c.b16 %v370, %v369
    %v382 = vpack.c.b16 %v372, %v371
    %v383 = vpack.c.b16 %v374, %v373
    %v384 = vpack.c.b16 %v376, %v375
    %393 = vmatprep.subr.bf16.mxu0 0
    %394 = vmatpush1.bf16.msra.mxu0 %v377
    %395 = vmatprep.subr.bf16.mxu0 0
    %396 = vmatpush1.bf16.msra.mxu0 %v378
    %397 = vmatprep.subr.bf16.mxu0 0
    %398 = vmatpush1.bf16.msra.mxu0 %v379
    %399 = vmatprep.subr.bf16.mxu0 0
    %400 = vmatpush1.bf16.msra.mxu0 %v380
    %401 = vmatprep.subr.bf16.mxu0 0
    %402 = vmatpush1.bf16.msra.mxu0 %v381
    %403 = vmatprep.subr.bf16.mxu0 0
    %404 = vmatpush1.bf16.msra.mxu0 %v382
    %405 = vmatprep.subr.bf16.mxu0 0
    %406 = vmatpush1.bf16.msra.mxu0 %v383
    %407 = vmatprep.subr.bf16.mxu0 0
    %408 = vmatpush1.bf16.msra.mxu0 %v384
    %409 = vmatprep.subr.bf16.mxu0 0
    %410 = vmatpush1.bf16.msra.mxu0 0
    %411 = vmatprep.subr.bf16.mxu0 0
    %412 = vmatpush1.bf16.msra.mxu0 0
    %413 = vmatprep.subr.bf16.mxu0 0
    %414 = vmatpush1.bf16.msra.mxu0 0
    %415 = vmatprep.subr.bf16.mxu0 0
    %416 = vmatpush1.bf16.msra.mxu0 0
    %417 = vmatprep.subr.bf16.mxu0 0
    %418 = vmatpush1.bf16.msra.mxu0 0
    %419 = vmatprep.subr.bf16.mxu0 0
    %420 = vmatpush1.bf16.msra.mxu0 0
    %421 = vmatprep.subr.bf16.mxu0 0
    %422 = vmatpush1.bf16.msra.mxu0 0
    %423 = vmatprep.subr.bf16.mxu0 0
    %424 = vmatpush1.bf16.msra.mxu0 0
    %425 = vmatprep.mubr.bf16.mxu0 0
    %426 = vmatmul.mubr.bf16.gmra.mrb[0].mxu0 %v321
    %v427 = vpop.f32.mrb[0].mxu0
    %v428 = vadd.f32 %v343, %v427
    %v429 = vpop.f32.mrb[0].mxu0
    %v430 = vpop.f32.mrb[0].mxu0
    %v431 = vpop.f32.mrb[0].mxu0
    %432 = vdwg.mxu0
    %vm433 = vcmp.gt.f32.partialorder %v428, 0.0
    %v434 = vmin.f32 %v428, 0.0
    %v435 = vmul.f32 %v434, 1.442695
    %v436 = vpow.pop %v435
    %v437 = vsub.f32 %v436, 1.0
    %v438 = vmul.f32 %v437, 1.6732632
    %v439 = vsel %vm433, %v428, %v438
    %v440 = vmul.f32 %v439, 1.050701
    %441 = vst [vmem:[#allocation10] sm:$0xff] %v440
    // Predicated region
    $region46: #{tpu_custom_call.1} parent=1 // pred_check
      _
    $region47: #{tpu_custom_call.1} parent=1 // pred_check_branch
      %443 = sbr.rel (0) target = $region49
    $region48: #{tpu_custom_call.1} parent=1 // pred_region
      %s445 = ssub.s32 128, 128
      %446 = vsyncadd [#allocation4], %s445
      %s448 = sshll.u32 [#allocation10], 4
      %s449 = int_to_ptr.vmem [resolvable:$true] %s448
      %451 = dma.vmem_to_hbm [thread:$0]  %s449, 128, %s7, [#allocation4]
    $region49: #{tpu_custom_call.1} parent=1 // pred_fallthru
      _
    // Predicated region
    $region50: #{tpu_custom_call.1} parent=1 // pred_check
      _
    $region51: #{tpu_custom_call.1} parent=1 // pred_check_branch
      %453 = sbr.rel (0) target = $region53
    $region52: #{tpu_custom_call.1} parent=1 // pred_region
      %454 = dma.done [#allocation4], 128
    $region53: #{tpu_custom_call.1} parent=1 // pred_fallthru
      _
    %455 = vsyncpa [#allocation3], 1
    %456 = vsyncpa [#allocation6], 1
    %457 = vsyncpa [#allocation9], 1
    %458 = vsyncpa [#allocation4], 1

</llo_original>
